<compile_context>
chip_gen: v6e
topology: v6e:2x2x1
jax: 0.10.0
libtpu: 0.0.40
codegen_flags: <defaults>
</compile_context>

<pallas_src>
import functools

import jax
import jax.numpy as jnp
from jax.experimental import pallas as pl
from jax.experimental.pallas import tpu as pltpu

LANE = 128            # lane width (last dim)
SUBLANE = 8           # f32 sublane height (second-to-last dim)
_GRIDLESS_MAX_LP = 1024   # below this a 1-D grid is pure pipeline overhead


def _round_up(x, m):
    return ((x + m - 1) // m) * m


# ----------------------------------------------------------------------------- #
# Classifier epilogue: bias add + cast + lane-dense store.
# Standalone so it can be fused into the GTN kernel's final reduction step
# (acting on that kernel's f32 accumulator) when the GTN encoder is available.
# ----------------------------------------------------------------------------- #
def _classifier_epilogue(acc_f32, b_ref, o_ref):
    o_ref[...] = (acc_f32 + b_ref[...].astype(jnp.float32)).astype(o_ref.dtype)


# ----------------------------------------------------------------------------- #
# Pallas kernel body: logits_tile = x_tile @ W_T_tile + b_tile
# Same body serves both the grid-less call and the label-tiled grid call
# (refs are the per-tile VMEM views in the latter).
# ----------------------------------------------------------------------------- #
def _classifier_kernel(x_ref, w_ref, b_ref, o_ref):
    acc = jnp.dot(x_ref[...], w_ref[...], preferred_element_type=jnp.float32)
    _classifier_epilogue(acc, b_ref, o_ref)


# ----------------------------------------------------------------------------- #
# One-time parameter prep (init/load time, NOT the serving path):
#   PyTorch nn.Linear stores weight as [L, D]; store it transposed [D, Lp] with
#   the label axis zero-padded to a multiple of 128 lanes (optionally bf16), and
#   the bias as a lane-padded f32 [1, Lp] row (added to the f32 accumulator).
# ----------------------------------------------------------------------------- #
def prepare_classifier_params(weight, bias, param_dtype=jnp.float32):
    L, D = weight.shape
    Lp = _round_up(L, LANE)
    w_t_padded = (
        jnp.zeros((D, Lp), param_dtype).at[:, :L].set(weight.T.astype(param_dtype))
    )
    b_padded = jnp.zeros((1, Lp), jnp.float32).at[0, :L].set(bias.astype(jnp.float32))
    return w_t_padded, b_padded, L


# ----------------------------------------------------------------------------- #
# Classifier forward (Pallas).
# ----------------------------------------------------------------------------- #
@functools.partial(jax.jit, static_argnames=("label_size",))
def classifier_pallas(outputs, w_t_padded, b_padded, *, label_size):
    B, D = outputs.shape
    Dw, Lp = w_t_padded.shape
    assert D == Dw

    # Sublane-pad the batch so MXU result rows / vst stores are full-vreg.
    Bp = _round_up(max(B, SUBLANE), SUBLANE)
    x = outputs
    if Bp != B:
        x = jnp.zeros((Bp, D), outputs.dtype).at[:B].set(outputs)
    if x.dtype != w_t_padded.dtype:
        x = x.astype(w_t_padded.dtype)   # bf16 activations when params are bf16

    out_shape = jax.ShapeDtypeStruct((Bp, Lp), outputs.dtype)
    vmem = pl.BlockSpec(memory_space=pltpu.MemorySpace.VMEM)

    if Lp <= _GRIDLESS_MAX_LP:
        # Toy / small label sizes: grid-less single-shot call, everything VMEM-resident.
        logits_padded = pl.pallas_call(
            _classifier_kernel,
            out_shape=out_shape,
            in_specs=[vmem, vmem, vmem],
            out_specs=vmem,
        )(x, w_t_padded, b_padded)
    else:
        # Real-sized label axis: tile Lp in lane-dense blocks (prefer 256-multiples for
        # the v6e/v7x 2x256^2 MXU), parallel grid axis for the v7x second TensorCore,
        # explicit VMEM budget so double-buffered weight tiles fit v7x's 64 MiB.
        tl = max(t for t in (512, 256, 128) if Lp % t == 0)
        logits_padded = pl.pallas_call(
            _classifier_kernel,
            out_shape=out_shape,
            grid_spec=pltpu.PrefetchScalarGridSpec(
                num_scalar_prefetch=0,
                grid=(Lp // tl,),
                in_specs=[
                    pl.BlockSpec((Bp, D), lambda j: (0, 0)),   # activations resident
                    pl.BlockSpec((D, tl), lambda j: (0, j)),   # weight streamed by tile
                    pl.BlockSpec((1, tl), lambda j: (0, j)),   # bias tile
                ],
                out_specs=pl.BlockSpec((Bp, tl), lambda j: (0, j)),
            ),
            compiler_params=pltpu.CompilerParams(
                dimension_semantics=("parallel",),
                vmem_limit_bytes=48 << 20,
            ),
        )(x, w_t_padded, b_padded)

    # Padded rows/cols are exact zeros (0-input / 0-weight / 0-bias); slice them off.
    return logits_padded[:B, :label_size]


# ----------------------------------------------------------------------------- #
# GTNClassifier forward (Pallas-backed classifier; GTN outputs are inputs)
# ----------------------------------------------------------------------------- #
def gtn_classifier_forward(gtn_outputs, gtn_pooled_out, w_t_padded, b_padded, label_size):
    logits = classifier_pallas(gtn_outputs, w_t_padded, b_padded, label_size=label_size)
    return logits, gtn_pooled_out


# ----------------------------------------------------------------------------- #
# Deterministic parameter init (PyTorch nn.Linear default: U(-1/sqrt(D), 1/sqrt(D)))
# ----------------------------------------------------------------------------- #
def init_classifier_params(key, out_dim, label_size):
    kw, kb = jax.random.split(key)
    bound = 1.0 / jnp.sqrt(jnp.float32(out_dim))
    weight = jax.random.uniform(kw, (label_size, out_dim), jnp.float32, -bound, bound)
    bias = jax.random.uniform(kb, (label_size,), jnp.float32, -bound, bound)
    return weight, bias


if __name__ == "__main__":
    # --- Test 1: module-implied toy shapes (opt.out_dim=32, opt.label_size=8, B=2) ----
    B, OUT_DIM, LABEL_SIZE, POOL_DIM = 2, 32, 8, 64

    root = jax.random.PRNGKey(0)
    k_out, k_pool, k_param = jax.random.split(root, 3)

    # Stand-ins for what the (unprovided) GTN encoder would emit.
    gtn_outputs = jax.random.normal(k_out, (B, OUT_DIM), jnp.float32)
    gtn_pooled = jax.random.normal(k_pool, (B, POOL_DIM), jnp.float32)

    cls_w, cls_b = init_classifier_params(k_param, OUT_DIM, LABEL_SIZE)
    w_t_padded, b_padded, L = prepare_classifier_params(cls_w, cls_b)  # f32, exact

    logits, pooled_out = gtn_classifier_forward(
        gtn_outputs, gtn_pooled, w_t_padded, b_padded, L
    )
    logits = jax.block_until_ready(logits)
    pooled_out = jax.block_until_ready(pooled_out)

    ref_logits = gtn_outputs @ cls_w.T + cls_b
    assert logits.shape == (B, LABEL_SIZE)
    assert pooled_out.shape == (B, POOL_DIM)
    assert jnp.allclose(logits, ref_logits, atol=1e-5, rtol=1e-5)

    # --- Test 2: larger shapes exercise the label-tiled grid path + bf16 weights -----
    B2, D2, L2 = 4, 256, 2000
    k1, k2, _ = jax.random.split(jax.random.PRNGKey(1), 3)
    x2 = jax.random.normal(k1, (B2, D2), jnp.float32)
    w2, b2 = init_classifier_params(k2, D2, L2)
    w2p, b2p, _ = prepare_classifier_params(w2, b2, param_dtype=jnp.bfloat16)

    logits2 = jax.block_until_ready(classifier_pallas(x2, w2p, b2p, label_size=L2))
    ref2 = x2 @ w2.T + b2
    assert logits2.shape == (B2, L2)
    # bf16 operands with f32 accumulation -> looser tolerance vs. the f32 reference.
    assert jnp.allclose(logits2, ref2, atol=6e-2, rtol=6e-2)

    print("KERNEL_OK")
</pallas_src>

<mosaic_0001>
module attributes {stable_mosaic.version = 11 : i64} {
  func.func @_classifier_kernel(%arg0: memref<8x32xf32, #tpu.memory_space<vmem>>, %arg1: memref<32x128xf32, #tpu.memory_space<vmem>>, %arg2: memref<1x128xf32, #tpu.memory_space<vmem>>, %arg3: memref<8x128xf32, #tpu.memory_space<vmem>>) attributes {dimension_semantics = [], scalar_prefetch = 0 : i64, scratch_operands = 0 : i64, tpu.core_type = #tpu.core_type<tc>} {
    %c0 = arith.constant 0 : index
    %c0_0 = arith.constant 0 : index
    %0 = vector.load %arg0[%c0, %c0_0] : memref<8x32xf32, #tpu.memory_space<vmem>>, vector<8x32xf32>
    %c0_1 = arith.constant 0 : index
    %c0_2 = arith.constant 0 : index
    %1 = vector.load %arg1[%c0_1, %c0_2] : memref<32x128xf32, #tpu.memory_space<vmem>>, vector<32x128xf32>
    %cst = arith.constant dense<0.000000e+00> : vector<8x128xf32>
    %2 = tpu.matmul %0, %1, %cst {dimension_numbers = #tpu.dot_dimension_numbers<[1], [0], [0], [1], [0, 0, 1, 1], [], []>} : vector<8x32xf32>, vector<32x128xf32>, vector<8x128xf32> -> vector<8x128xf32>
    %c0_3 = arith.constant 0 : index
    %c0_4 = arith.constant 0 : index
    %3 = vector.load %arg2[%c0_3, %c0_4] : memref<1x128xf32, #tpu.memory_space<vmem>>, vector<1x128xf32>
    %4 = vector.broadcast %3 : vector<1x128xf32> to vector<8x128xf32>
    %5 = arith.addf %2, %4 : vector<8x128xf32>
    %c0_5 = arith.constant 0 : index
    %c0_6 = arith.constant 0 : index
    %6 = vector.load %arg3[%c0_5, %c0_6] : memref<8x128xf32, #tpu.memory_space<vmem>>, vector<8x128xf32>
    tpu.vector_store %arg3[%c0_5, %c0_6], %5 {strides = array<i32>} : memref<8x128xf32, #tpu.memory_space<vmem>>, vector<8x128xf32>,
    return
  }
}

</mosaic_0001>

<llo_original>
// kernel: classifier_pallas.1
$region0: #{classifier_pallas.1}
  #allocation0 [shape = 'u32[]', space=smem, size = 0x4, offset = 0x4, fixed_abs, tag = 'smem constant byte address 0x4 - core index']
  #allocation1 [shape = 'u32[144,128]{1,0:T(1,128)}', space=vmem, size = 0x12000, scoped, tag = 'internal scratch']
  %s0 = inlined_call_operand.vmem [shape: f32[8,32], index: 0, kind: input, shape index: {}]
  %s1 = inlined_call_operand.hbm [shape: f32[32,128], index: 1, kind: input, shape index: {}]
  %s2 = inlined_call_operand.vmem [shape: f32[1,128], index: 2, kind: input, shape index: {}]
  %s3 = inlined_call_operand.vmem [shape: f32[8,128], index: 3, kind: output, shape index: {}]
  %s4 = sld [smem:[#allocation0]]
  $region26: #{classifier_pallas.1} parent=0
    _
  %s6 = ssub.s32 1, %s4
  %s7 = scalar_select 0, %s6, %s4
  $region1: #{classifier_pallas.1} parent=0
    #allocation2 [shape = 'u8[16384]{0}', space=vmem, size = 0x4000, scoped, tag = 'input window, operand 1, single buffered']
    #allocation3 [shape = 's32[1]{0}', space=sflag, size = 0x4, scoped, tag = 'scoped memory for classifier_pallas.1']
    %8 = vsyncpa [#allocation3], 0
    // Predicated region
    $region2: #{classifier_pallas.1} parent=1 // pred_check
      _
    $region3: #{classifier_pallas.1} parent=1 // pred_check_branch
      %10 = sbr.rel (0) target = $region5
    $region4: #{classifier_pallas.1} parent=1 // pred_region
      _
    $region5: #{classifier_pallas.1} parent=1 // pred_fallthru
      _
    // Predicated region
    $region6: #{classifier_pallas.1} parent=1 // pred_check
      _
    $region7: #{classifier_pallas.1} parent=1 // pred_check_branch
      %12 = sbr.rel (0) target = $region9
    $region8: #{classifier_pallas.1} parent=1 // pred_region
      %s14 = ssub.s32 512, 512
      %15 = vsyncadd [#allocation3], %s14
      %s16 = sshll.u32 [#allocation2], 4
      %s17 = int_to_ptr.vmem [resolvable:$true] %s16
      %22 = dma.hbm_to_vmem [thread:$0]  %s1, 512, %s17, [#allocation3], 128, 128, 8
    $region9: #{classifier_pallas.1} parent=1 // pred_fallthru
      _
    // Predicated region
    $region10: #{classifier_pallas.1} parent=1 // pred_check
      _
    $region11: #{classifier_pallas.1} parent=1 // pred_check_branch
      %24 = sbr.rel (0) target = $region13
    $region12: #{classifier_pallas.1} parent=1 // pred_region
      _
    $region13: #{classifier_pallas.1} parent=1 // pred_fallthru
      _
    // Predicated region
    $region14: #{classifier_pallas.1} parent=1 // pred_check
      _
    $region15: #{classifier_pallas.1} parent=1 // pred_check_branch
      %26 = sbr.rel (0) target = $region17
    $region16: #{classifier_pallas.1} parent=1 // pred_region
      %27 = dma.done [#allocation3], 512
    $region17: #{classifier_pallas.1} parent=1 // pred_fallthru
      _
    %v28 = vld [vmem:[%s0] sm:$0xff]
    %v29 = vld [vmem:[#allocation2] sm:$0xff]
    %v30 = vld [vmem:[#allocation2 + $0x8] sm:$0xff]
    %v31 = vld [vmem:[#allocation2 + $0x10] sm:$0xff]
    %v32 = vld [vmem:[#allocation2 + $0x18] sm:$0xff]
    %v33 = vld [vmem:[%s2] sm:$0x1]
    %v35 = vlaneseq
    %v36 = vshrl.u32 %v35, 7
    %v37 = vsub.s32 0, %v36
    %v38 = vrot.slane %v33, %v37
    %vm40 = vcmask 261120
    %v42 = vsel %vm40, %v28, 0
    %44 = vmatprep.subr.mxu0 0.0
    %45 = vmatpush1.msra.mxu0 0.0
    %46 = vmatprep.subr.mxu0 0.0
    %47 = vmatpush1.msra.mxu0 0.0
    %48 = vmatprep.subr.mxu0 0.0
    %49 = vmatpush1.msra.mxu0 0.0
    %50 = vmatprep.subr.mxu0 0.0
    %51 = vmatpush1.msra.mxu0 0.0
    %52 = vmatprep.subr.mxu0 0.0
    %53 = vmatpush1.msra.mxu0 0.0
    %54 = vmatprep.subr.mxu0 0.0
    %55 = vmatpush1.msra.mxu0 0.0
    %56 = vmatprep.subr.mxu0 0.0
    %57 = vmatpush1.msra.mxu0 0.0
    %58 = vmatprep.subr.mxu0 0.0
    %59 = vmatpush1.msra.mxu0 0.0
    %60 = vmatprep.subr.mxu0 0.0
    %61 = vmatpush1.msra.mxu0 0.0
    %62 = vmatprep.subr.mxu0 0.0
    %63 = vmatpush1.msra.mxu0 0.0
    %64 = vmatprep.subr.mxu0 0.0
    %65 = vmatpush1.msra.mxu0 0.0
    %66 = vmatprep.subr.mxu0 0.0
    %67 = vmatpush1.msra.mxu0 0.0
    %68 = vmatprep.subr.mxu0 0.0
    %69 = vmatpush1.msra.mxu0 %v32
    %70 = vmatprep.subr.mxu0 0.0
    %71 = vmatpush1.msra.mxu0 %v31
    %72 = vmatprep.subr.mxu0 0.0
    %73 = vmatpush1.msra.mxu0 %v30
    %74 = vmatprep.subr.mxu0 0.0
    %75 = vmatpush1.msra.mxu0 %v29
    %76 = vmatprep.subr.mxu0 0.0
    %77 = vmatpush2.msra.mxu0 0.0
    %78 = vmatprep.subr.mxu0 0.0
    %79 = vmatpush2.msra.mxu0 0.0
    %80 = vmatprep.subr.mxu0 0.0
    %81 = vmatpush2.msra.mxu0 0.0
    %82 = vmatprep.subr.mxu0 0.0
    %83 = vmatpush2.msra.mxu0 0.0
    %84 = vmatprep.subr.mxu0 0.0
    %85 = vmatpush2.msra.mxu0 0.0
    %86 = vmatprep.subr.mxu0 0.0
    %87 = vmatpush2.msra.mxu0 0.0
    %88 = vmatprep.subr.mxu0 0.0
    %89 = vmatpush2.msra.mxu0 0.0
    %90 = vmatprep.subr.mxu0 0.0
    %91 = vmatpush2.msra.mxu0 0.0
    %92 = vmatprep.subr.mxu0 0.0
    %93 = vmatpush2.msra.mxu0 0.0
    %94 = vmatprep.subr.mxu0 0.0
    %95 = vmatpush2.msra.mxu0 0.0
    %96 = vmatprep.subr.mxu0 0.0
    %97 = vmatpush2.msra.mxu0 0.0
    %98 = vmatprep.subr.mxu0 0.0
    %99 = vmatpush2.msra.mxu0 0.0
    %100 = vmatprep.subr.mxu0 0.0
    %101 = vmatpush2.msra.mxu0 0.0
    %102 = vmatprep.subr.mxu0 0.0
    %103 = vmatpush2.msra.mxu0 0.0
    %104 = vmatprep.subr.mxu0 0.0
    %105 = vmatpush2.msra.mxu0 0.0
    %106 = vmatprep.subr.mxu0 0.0
    %107 = vmatpush2.msra.mxu0 0.0
    %108 = vmatprep.mubr.f32.mxu0 0.0
    %109 = vmatmul.mubr.f32.gmra.mxu0 %v42
    %v110 = vpop.f32.mrf.mxu0
    %v111 = vadd.f32 %v38, %v110
    %v112 = vpop.f32.mrf.mxu0
    %113 = vdwg.mxu0
    %114 = vst [vmem:[%s3] sm:$0xff] %v111
    // Predicated region
    $region18: #{classifier_pallas.1} parent=1 // pred_check
      _
    $region19: #{classifier_pallas.1} parent=1 // pred_check_branch
      %116 = sbr.rel (0) target = $region21
    $region20: #{classifier_pallas.1} parent=1 // pred_region
      _
    $region21: #{classifier_pallas.1} parent=1 // pred_fallthru
      _
    // Predicated region
    $region22: #{classifier_pallas.1} parent=1 // pred_check
      _
    $region23: #{classifier_pallas.1} parent=1 // pred_check_branch
      %118 = sbr.rel (0) target = $region25
    $region24: #{classifier_pallas.1} parent=1 // pred_region
      _
    $region25: #{classifier_pallas.1} parent=1 // pred_fallthru
      _
    %119 = vsyncpa [#allocation3], 1

</llo_original>
